<compile_context>
chip_gen: v6e
topology: v6e:2x2x1
jax: 0.10.0
libtpu: 0.0.40
codegen_flags: <defaults>
</compile_context>

<pallas_src>
import functools

import jax
import jax.numpy as jnp
from jax.experimental import pallas as pl
from jax.experimental.pallas import tpu as pltpu

_MIB = 1024 * 1024


def _layernorm_kernel(x_ref, g_ref, b_ref, o_ref, *, eps, denom):
    # x_ref: (tile_rows, F) in io dtype; g_ref / b_ref: (1, F) already f32.
    x = x_ref[...].astype(jnp.float32)
    mean = jnp.mean(x, axis=-1, keepdims=True)

    # Two-pass centered variance: strict parity with torch.std (avoids the
    # E[x^2]-mean^2 cancellation). Overwrite x with the centered values so only
    # one full-tile f32 temporary stays live across the statistics pass.
    x = x - mean

    # torch.std default is unbiased (divide by N-1); denom = max(F-1, 1).
    var = jnp.sum(x * x, axis=-1, keepdims=True) * (1.0 / denom)
    std = jnp.sqrt(var)

    # Per-row reciprocal of the (tile_rows, 1) column, then broadcast-multiply:
    # removes F divides/row. approx=False keeps strict numerics vs torch; the
    # kernel is HBM-bound so the VALU cost of the exact form is hidden anyway.
    inv = pl.reciprocal(std + eps, approx=False)

    o_ref[...] = ((x * inv) * g_ref[...] + b_ref[...]).astype(o_ref.dtype)


def _vmem_capacity_bytes():
    """Per-TensorCore VMEM capacity; conservative fallback if the query fails."""
    try:
        return int(pltpu.get_tpu_info().vmem_capacity_bytes)
    except Exception:
        return 64 * _MIB  # v7x-sized fallback: safe on every generation


def _num_tensorcores():
    """2 TensorCores/chip on v7x, 1 on v5e/v6e. Defensive default of 1."""
    try:
        kind = jax.devices()[0].device_kind.lower()
        if "v7" in kind or "7x" in kind:
            return 2
    except Exception:
        pass
    return 1


def _round_up(n, m):
    return ((n + m - 1) // m) * m


def _pick_tile_rows(rows, feat, dtype, vmem_capacity, num_tc):
    """Largest row tile that keeps double-buffered I/O + f32 temps in VMEM."""
    itemsize = jnp.dtype(dtype).itemsize
    # 2x double-buffered input tile + 2x double-buffered output tile (io dtype)
    # + ~2 full-tile f32 intermediates (upcast/centered x, x*x before reduce).
    bytes_per_row = feat * (4 * itemsize + 2 * 4)

    # Generation-aware budget: ~37.5% of VMEM -> ~48 MiB on 128-MiB v5e/v6e,
    # ~24 MiB on 64-MiB-per-TC v7x. No artificial row cap: only the budget and
    # the row count bound the tile.
    budget = (vmem_capacity * 3) // 8
    tr = budget // max(bytes_per_row, 1)
    tr = max(8, (tr // 8) * 8)

    # No point tiling past the (8-rounded) row count.
    tr = min(tr, _round_up(rows, 8))

    # v7x megacore: guarantee >= 2 grid steps so both TensorCores get work on
    # the "parallel" axis. No-op gate on single-TC chips.
    if num_tc >= 2 and rows > 8:
        tr = min(tr, _round_up(pl.cdiv(rows, 2), 8))

    return max(8, tr)


def layer_norm(x, a_2, b_2, eps=1e-6, tile_rows=None):
    """x: (..., features). a_2, b_2: (features,)."""
    orig_shape = x.shape
    feat = orig_shape[-1]
    rows = 1
    for d in orig_shape[:-1]:
        rows *= d

    x2 = x.reshape(rows, feat)
    # Pre-cast gamma/beta to f32 in the wrapper: they are grid-resident
    # (invariant index_map), so this removes the per-step upcast from the
    # kernel at negligible extra HBM cost.
    g2 = a_2.reshape(1, feat).astype(jnp.float32)
    bb2 = b_2.reshape(1, feat).astype(jnp.float32)

    vmem_capacity = _vmem_capacity_bytes()
    num_tc = _num_tensorcores()

    if tile_rows is None:
        tile_rows = _pick_tile_rows(rows, feat, x.dtype, vmem_capacity, num_tc)

    # No host-side padding: Pallas masks the partial last block; every row is
    # normalized independently so garbage rows cannot contaminate valid ones.
    grid = (pl.cdiv(rows, tile_rows),)
    denom = max(feat - 1, 1)  # feat == 1: torch yields NaN std; we stay finite.

    # TODO(synk): if feat is not a multiple of 128 (e.g. the hidden=32 demo),
    # vreg lanes are under-filled and stores are masked partial vst; a
    # lane-dense repack (128//feat rows per lane-row + segmented reduction)
    # would be needed to remove that — left out to keep exact per-row layout.

    kernel = functools.partial(_layernorm_kernel, eps=eps, denom=denom)

    # Leave headroom vs physical VMEM: ~78% of capacity (~50 MiB on v7x's
    # 64 MiB/TC, ~100 MiB on v5e/v6e's 128 MiB) instead of reserving it all.
    vmem_limit = min(int(vmem_capacity * 0.78), vmem_capacity - 8 * _MIB)
    vmem_limit = max(vmem_limit, 32 * _MIB)

    out = pl.pallas_call(
        kernel,
        out_shape=jax.ShapeDtypeStruct((rows, feat), x.dtype),
        grid_spec=pltpu.PrefetchScalarGridSpec(
            num_scalar_prefetch=0,
            grid=grid,
            in_specs=[
                pl.BlockSpec((tile_rows, feat), lambda i: (i, 0)),
                # gamma/beta: grid-invariant index_map -> fetched once, stays
                # resident across all grid steps.
                pl.BlockSpec((1, feat), lambda i: (0, 0)),
                pl.BlockSpec((1, feat), lambda i: (0, 0)),
            ],
            out_specs=pl.BlockSpec((tile_rows, feat), lambda i: (i, 0)),
        ),
        compiler_params=pltpu.CompilerParams(
            dimension_semantics=("parallel",),  # megacore sharding on v7x
            vmem_limit_bytes=vmem_limit,
        ),
    )(x2, g2, bb2)

    return out.reshape(orig_shape)


if __name__ == "__main__":
    key = jax.random.PRNGKey(0)
    batch, seq, hidden = 2, 8, 32

    x = jax.random.normal(key, (batch, seq, hidden), dtype=jnp.float32)

    # Deterministic parameter init, matching nn.Parameter(torch.ones/zeros(features)).
    a_2 = jnp.ones((hidden,), dtype=jnp.float32)
    b_2 = jnp.zeros((hidden,), dtype=jnp.float32)

    out = layer_norm(x, a_2, b_2, eps=1e-6)
    out = jax.block_until_ready(out)

    # Reference check in plain JAX (unbiased std, eps on std).
    mean = jnp.mean(x, axis=-1, keepdims=True)
    std = jnp.std(x, axis=-1, keepdims=True, ddof=1)
    ref = a_2 * (x - mean) / (std + 1e-6) + b_2
    assert jnp.allclose(out, ref, atol=1e-5, rtol=1e-5), "mismatch vs reference"

    print("KERNEL_OK")
</pallas_src>

<mosaic_0001>
module attributes {stable_mosaic.version = 11 : i64} {
  func.func @_layernorm_kernel(%arg0: i32, %arg1: memref<16x32xf32, #tpu.memory_space<vmem>>, %arg2: memref<1x32xf32, #tpu.memory_space<vmem>>, %arg3: memref<1x32xf32, #tpu.memory_space<vmem>>, %arg4: memref<16x32xf32, #tpu.memory_space<vmem>>) attributes {dimension_semantics = [#tpu.dimension_semantics<parallel>], iteration_bounds = array<i64: 1>, scalar_prefetch = 0 : i64, scratch_operands = 0 : i64, tpu.core_type = #tpu.core_type<tc>, window_params = [{transform_indices = @transform_0, window_bounds = array<i64: 16, 32>}, {pipeline_mode = #tpu.pipeline_mode<synchronous>, transform_indices = @transform_1, window_bounds = array<i64: 1, 32>}, {pipeline_mode = #tpu.pipeline_mode<synchronous>, transform_indices = @transform_2, window_bounds = array<i64: 1, 32>}, {transform_indices = @transform_3, window_bounds = array<i64: 16, 32>}]} {
    %c0 = arith.constant 0 : index
    %c0_0 = arith.constant 0 : index
    %0 = vector.load %arg1[%c0, %c0_0] : memref<16x32xf32, #tpu.memory_space<vmem>>, vector<16x32xf32>
    %cst = arith.constant dense<0.000000e+00> : vector<16xf32>
    %1 = vector.multi_reduction <add>, %0, %cst [1] : vector<16x32xf32> to vector<16xf32>
    %2 = vector.shape_cast %1 : vector<16xf32> to vector<16x1xf32>
    %cst_1 = arith.constant 3.200000e+01 : f32
    %3 = vector.broadcast %cst_1 : f32 to vector<16x1xf32>
    %4 = arith.divf %2, %3 : vector<16x1xf32>
    %5 = vector.broadcast %4 : vector<16x1xf32> to vector<16x32xf32>
    %6 = arith.subf %0, %5 : vector<16x32xf32>
    %7 = arith.mulf %6, %6 : vector<16x32xf32>
    %cst_2 = arith.constant dense<0.000000e+00> : vector<16xf32>
    %8 = vector.multi_reduction <add>, %7, %cst_2 [1] : vector<16x32xf32> to vector<16xf32>
    %9 = vector.shape_cast %8 : vector<16xf32> to vector<16x1xf32>
    %cst_3 = arith.constant 0.0322580636 : f32
    %10 = vector.broadcast %cst_3 : f32 to vector<16x1xf32>
    %11 = arith.mulf %9, %10 : vector<16x1xf32>
    %12 = math.sqrt %11 : vector<16x1xf32>
    %cst_4 = arith.constant 9.99999997E-7 : f32
    %13 = vector.broadcast %cst_4 : f32 to vector<16x1xf32>
    %14 = arith.addf %12, %13 : vector<16x1xf32>
    %15 = tpu.reciprocal %14 : vector<16x1xf32> -> vector<16x1xf32>
    %16 = vector.broadcast %15 : vector<16x1xf32> to vector<16x32xf32>
    %17 = arith.mulf %6, %16 : vector<16x32xf32>
    %c0_5 = arith.constant 0 : index
    %c0_6 = arith.constant 0 : index
    %18 = vector.load %arg2[%c0_5, %c0_6] : memref<1x32xf32, #tpu.memory_space<vmem>>, vector<1x32xf32>
    %19 = vector.broadcast %18 : vector<1x32xf32> to vector<16x32xf32>
    %20 = arith.mulf %17, %19 : vector<16x32xf32>
    %c0_7 = arith.constant 0 : index
    %c0_8 = arith.constant 0 : index
    %21 = vector.load %arg3[%c0_7, %c0_8] : memref<1x32xf32, #tpu.memory_space<vmem>>, vector<1x32xf32>
    %22 = vector.broadcast %21 : vector<1x32xf32> to vector<16x32xf32>
    %23 = arith.addf %20, %22 : vector<16x32xf32>
    %c0_9 = arith.constant 0 : index
    %c0_10 = arith.constant 0 : index
    %24 = vector.load %arg4[%c0_9, %c0_10] : memref<16x32xf32, #tpu.memory_space<vmem>>, vector<16x32xf32>
    tpu.vector_store %arg4[%c0_9, %c0_10], %23 {strides = array<i32>} : memref<16x32xf32, #tpu.memory_space<vmem>>, vector<16x32xf32>,
    return
  }
  func.func @transform_0(%arg0: i32) -> (i32, i32) {
    %c0_i32 = arith.constant 0 : i32
    %c0_i32_0 = arith.constant 0 : i32
    return %arg0, %c0_i32 : i32, i32
  }
  func.func @transform_1(%arg0: i32) -> (i32, i32) {
    %c0_i32 = arith.constant 0 : i32
    %c0_i32_0 = arith.constant 0 : i32
    %c0_i32_1 = arith.constant 0 : i32
    return %c0_i32, %c0_i32_0 : i32, i32
  }
  func.func @transform_2(%arg0: i32) -> (i32, i32) {
    %c0_i32 = arith.constant 0 : i32
    %c0_i32_0 = arith.constant 0 : i32
    %c0_i32_1 = arith.constant 0 : i32
    return %c0_i32, %c0_i32_0 : i32, i32
  }
  func.func @transform_3(%arg0: i32) -> (i32, i32) {
    %c0_i32 = arith.constant 0 : i32
    %c0_i32_0 = arith.constant 0 : i32
    return %arg0, %c0_i32 : i32, i32
  }
}

</mosaic_0001>

<llo_original>
// kernel: tpu_custom_call.1
$region0: #{tpu_custom_call.1}
  #allocation0 [shape = 'u32[]', space=smem, size = 0x4, offset = 0x4, fixed_abs, tag = 'smem constant byte address 0x4 - core index']
  #allocation1 [shape = 'u32[144,128]{1,0:T(1,128)}', space=vmem, size = 0x12000, scoped, tag = 'internal scratch']
  %s0 = inlined_call_operand.hbm [shape: f32[16,32], index: 0, kind: input, shape index: {}]
  %s1 = inlined_call_operand.vmem [shape: f32[1,32], index: 1, kind: input, shape index: {}]
  %s2 = inlined_call_operand.vmem [shape: f32[1,32], index: 2, kind: input, shape index: {}]
  %s3 = inlined_call_operand.hbm [shape: f32[16,32], index: 3, kind: output, shape index: {}]
  %s4 = sld [smem:[#allocation0]]
  $region26: #{tpu_custom_call.1} parent=0
    _
  %s6 = ssub.s32 1, %s4
  %s7 = scalar_select 0, %s6, %s4
  $region1: #{tpu_custom_call.1} parent=0
    #allocation2 [shape = 'u8[8192]{0}', space=vmem, size = 0x2000, scoped, tag = 'input window, operand 0, single buffered']
    #allocation3 [shape = 's32[1]{0}', space=sflag, size = 0x4, scoped, tag = 'scoped memory for tpu_custom_call.1']
    #allocation4 [shape = 's32[1]{0}', space=sflag, size = 0x4, scoped, tag = 'scoped memory for tpu_custom_call.1']
    #allocation5 [shape = 'u8[8192]{0}', space=vmem, size = 0x2000, scoped, tag = 'output window, operand 0, single buffered']
    %8 = vsyncpa [#allocation3], 0
    %9 = vsyncpa [#allocation4], 0
    // Predicated region
    $region2: #{tpu_custom_call.1} parent=1 // pred_check
      _
    $region3: #{tpu_custom_call.1} parent=1 // pred_check_branch
      %11 = sbr.rel (0) target = $region5
    $region4: #{tpu_custom_call.1} parent=1 // pred_region
      %s13 = ssub.s32 256, 256
      %14 = vsyncadd [#allocation3], %s13
      %s15 = sshll.u32 [#allocation2], 4
      %s16 = int_to_ptr.vmem [resolvable:$true] %s15
      %21 = dma.hbm_to_vmem [thread:$0]  %s0, 256, %s16, [#allocation3], 128, 128, 8
    $region5: #{tpu_custom_call.1} parent=1 // pred_fallthru
      _
    // Predicated region
    $region6: #{tpu_custom_call.1} parent=1 // pred_check
      _
    $region7: #{tpu_custom_call.1} parent=1 // pred_check_branch
      %23 = sbr.rel (0) target = $region9
    $region8: #{tpu_custom_call.1} parent=1 // pred_region
      _
    $region9: #{tpu_custom_call.1} parent=1 // pred_fallthru
      _
    // Predicated region
    $region10: #{tpu_custom_call.1} parent=1 // pred_check
      _
    $region11: #{tpu_custom_call.1} parent=1 // pred_check_branch
      %25 = sbr.rel (0) target = $region13
    $region12: #{tpu_custom_call.1} parent=1 // pred_region
      _
    $region13: #{tpu_custom_call.1} parent=1 // pred_fallthru
      _
    // Predicated region
    $region14: #{tpu_custom_call.1} parent=1 // pred_check
      _
    $region15: #{tpu_custom_call.1} parent=1 // pred_check_branch
      %27 = sbr.rel (0) target = $region17
    $region16: #{tpu_custom_call.1} parent=1 // pred_region
      %28 = dma.done [#allocation3], 256
    $region17: #{tpu_custom_call.1} parent=1 // pred_fallthru
      _
    %v29 = vld [vmem:[#allocation2] sm:$0xff]
    %v30 = vld [vmem:[#allocation2 + $0x8] sm:$0xff]
    %vm31 = vcmask 261120
    %v32 = vsel %vm31, %v29, 0.0
    %33 = vadd.xlane.f32.xlu0 %v32
    %v34 = vpop.xlane.xlu0 %33
    %v35 = vsel %vm31, %v30, 0.0
    %36 = vadd.xlane.f32.xlu0 %v35
    %v37 = vpop.xlane.xlu0 %36
    %v38 = vrcp.pop 32.0
    %v39 = vmul.f32 %v34, %v38
    %v40 = vmul.f32 %v37, %v38
    %v41 = vsub.f32 %v29, %v39
    %v42 = vsub.f32 %v30, %v40
    %v43 = vmul.f32 %v41, %v41
    %v44 = vmul.f32 %v42, %v42
    %v45 = vsel %vm31, %v43, 0.0
    %46 = vadd.xlane.f32.xlu0 %v45
    %v47 = vpop.xlane.xlu0 %46
    %v48 = vsel %vm31, %v44, 0.0
    %49 = vadd.xlane.f32.xlu0 %v48
    %v50 = vpop.xlane.xlu0 %49
    %v51 = vmul.f32 %v47, 0.032258064
    %v52 = vmul.f32 %v50, 0.032258064
    %v53 = vrsqrt.pop %v51
    %v54 = vmul.f32 %v51, %v53
    %vm55 = vcmp.eq.f32.partialorder %v51, inf
    %v56 = vsel %vm55, %v51, %v54
    %vm57 = vcmp.eq.f32.partialorder %v51, 0.0
    %v58 = vand.u32 %v51, 2147483648
    %v59 = vsel %vm57, %v58, %v56
    %v60 = vrsqrt.pop %v52
    %v61 = vmul.f32 %v52, %v60
    %vm62 = vcmp.eq.f32.partialorder %v52, inf
    %v63 = vsel %vm62, %v52, %v61
    %vm64 = vcmp.eq.f32.partialorder %v52, 0.0
    %v65 = vand.u32 %v52, 2147483648
    %v66 = vsel %vm64, %v65, %v63
    %v67 = vadd.f32 %v59, 1e-06
    %v68 = vadd.f32 %v66, 1e-06
    %v69 = vrcp.pop %v67
    %v70 = vrcp.pop %v68
    %v71 = vmul.f32 %v41, %v69
    %v72 = vmul.f32 %v42, %v70
    %v73 = vld [vmem:[%s1] sm:$0x1]
    %v75 = vlaneseq
    %v76 = vshrl.u32 %v75, 7
    %v77 = vsub.s32 0, %v76
    %v78 = vrot.slane %v73, %v77
    %v80 = vmul.f32 %v71, %v78
    %v81 = vmul.f32 %v72, %v78
    %v82 = vld [vmem:[%s2] sm:$0x1]
    %v84 = vlaneseq
    %v85 = vshrl.u32 %v84, 7
    %v86 = vsub.s32 0, %v85
    %v87 = vrot.slane %v82, %v86
    %v89 = vadd.f32 %v80, %v87
    %v90 = vadd.f32 %v81, %v87
    %91 = vst.msk [vmem:[#allocation5] sm:$0xff] %vm31, %v89
    %92 = vst.msk [vmem:[#allocation5 + $0x8] sm:$0xff] %vm31, %v90
    // Predicated region
    $region18: #{tpu_custom_call.1} parent=1 // pred_check
      _
    $region19: #{tpu_custom_call.1} parent=1 // pred_check_branch
      %94 = sbr.rel (0) target = $region21
    $region20: #{tpu_custom_call.1} parent=1 // pred_region
      %s96 = ssub.s32 256, 256
      %97 = vsyncadd [#allocation4], %s96
      %s98 = sshll.u32 [#allocation5], 4
      %s99 = int_to_ptr.vmem [resolvable:$true] %s98
      %104 = dma.vmem_to_hbm [thread:$0]  %s99, 256, %s3, [#allocation4], 128, 128, 8
    $region21: #{tpu_custom_call.1} parent=1 // pred_fallthru
      _
    // Predicated region
    $region22: #{tpu_custom_call.1} parent=1 // pred_check
      _
    $region23: #{tpu_custom_call.1} parent=1 // pred_check_branch
      %106 = sbr.rel (0) target = $region25
    $region24: #{tpu_custom_call.1} parent=1 // pred_region
      %107 = dma.done [#allocation4], 256
    $region25: #{tpu_custom_call.1} parent=1 // pred_fallthru
      _
    %108 = vsyncpa [#allocation3], 1
    %109 = vsyncpa [#allocation4], 1

</llo_original>
